<compile_context>
chip_gen: v7x
topology: tpu7x:2x2x1
jax: 0.10.0
libtpu: 0.0.40
codegen_flags: <defaults>
</compile_context>

<pallas_src>
import functools

import numpy as np

import jax
import jax.numpy as jnp
from jax import lax
from jax.experimental import pallas as pl
from jax.experimental.pallas import tpu as pltpu

_MIB = 1024 * 1024


def _l2_normalize_kernel(x_ref, o_ref):
    """F.normalize(x, dim=1): x / max(||x||_2, 1e-12) on one row tile."""
    x = x_ref[...].astype(jnp.float32)
    ss = jnp.sum(x * x, axis=1, keepdims=True)
    # x / max(||x||, 1e-12)  ==  x * rsqrt(max(ss, 1e-24))
    inv_norm = lax.rsqrt(jnp.maximum(ss, 1e-24))
    o_ref[...] = (x * inv_norm).astype(o_ref.dtype)


def _siglip_tri_kernel(i_idx_ref, j_idx_ref, xr_ref, xc_ref, lab_r_ref,
                       lab_c_ref, loss_ref, acc_ref, *, temperature, n_total):
    """One upper-triangular (block x block) tile of the SigLip BCE sum."""
    t = pl.program_id(0)
    i = i_idx_ref[t]
    j = j_idx_ref[t]

    @pl.when(t == 0)
    def _init():
        acc_ref[...] = jnp.zeros_like(acc_ref)

    inv_t = jnp.float32(1.0 / temperature)
    # Contract on D of both operands -> MXU fed directly, no transposed copy.
    sim = lax.dot_general(
        xr_ref[...], xc_ref[...],
        dimension_numbers=(((1,), (1,)), ((), ())),
        preferred_element_type=jnp.float32,
    ) * inv_t                                                    # (bm, bn) f32

    lm = (lab_r_ref[...] == lab_c_ref[...]).astype(jnp.float32)  # (bm, bn)

    # BCE(sigmoid(s), y) = softplus(s) - y*s, numerically stable form.
    # (PyTorch's log clamp at -100 never engages: |s| <= 1/temperature here.)
    bce = jnp.maximum(sim, 0.0) - lm * sim + jnp.log(1.0 + jnp.exp(-jnp.abs(sim)))

    @pl.when(i != j)
    def _offdiag_tile():
        # Symmetry: tile (j, i) is identical, so count this one twice.
        acc_ref[...] = acc_ref[...] + 2.0 * jnp.sum(bce, axis=0, keepdims=True)

    @pl.when(i == j)
    def _diag_tile():
        # Only diagonal blocks pay the iota-mask cost (drop self-similarity).
        r = lax.broadcasted_iota(jnp.int32, bce.shape, 0)
        c = lax.broadcasted_iota(jnp.int32, bce.shape, 1)
        masked = jnp.where(r == c, 0.0, bce)
        acc_ref[...] = acc_ref[...] + jnp.sum(masked, axis=0, keepdims=True)

    @pl.when(t == pl.num_programs(0) - 1)
    def _finalize():
        denom = jnp.float32(n_total) * jnp.float32(n_total - 1)
        loss_ref[0, 0] = jnp.sum(acc_ref[...]) / denom


def _pick_block(n, d, emb_bytes, budget_bytes=40 * _MIB):
    """Largest aligned tile whose double-buffered inputs fit the VMEM budget."""
    candidates = [b for b in (512, 256, 128) if n % b == 0 and n >= b]
    for b in candidates:
        # 2 inputs x 2 pipeline buffers of (b, d) tiles + f32 (b, b) temporaries.
        if 4 * b * d * emb_bytes + 12 * b * b <= budget_bytes:
            return b
    if candidates:
        return candidates[-1]
    # TODO(synk): pad N to a block multiple (with a validity mask) instead of
    # the single full-N tile for batches that are not multiples of 128.
    return n


def _vmem_limit(need_bytes):
    """Explicit scoped-VMEM limit: above v5e's 16 MiB default, below v7x's 64."""
    return int(min(56 * _MIB, max(32 * _MIB, need_bytes + 16 * _MIB)))


def siglip_loss(embeddings, labels, temperature=0.07, *, block=None,
                matmul_dtype=jnp.bfloat16):
    """embeddings: (N, D) float array; labels: (N,) int array -> scalar f32 loss.

    matmul_dtype defaults to bfloat16 (MXU fast path on v5e/v6e/v7x, f32
    accumulation); pass jnp.float32 for bitwise-tight validation.
    """
    n, d = embeddings.shape
    emb_bytes = jnp.dtype(matmul_dtype).itemsize
    if block is None:
        block = _pick_block(n, d, emb_bytes)
    assert n % block == 0, "batch size must be divisible by the tile size"
    grid_m = n // block

    # ---- Pass 1: normalize rows once (O(N*D)); f32 math, matmul_dtype store.
    p1_need = 2 * block * d * (jnp.dtype(embeddings.dtype).itemsize + emb_bytes)
    emb_n = pl.pallas_call(
        _l2_normalize_kernel,
        out_shape=jax.ShapeDtypeStruct((n, d), matmul_dtype),
        grid=(grid_m,),
        in_specs=[pl.BlockSpec((block, d), lambda i: (i, 0))],
        out_specs=pl.BlockSpec((block, d), lambda i: (i, 0)),
        compiler_params=pltpu.CompilerParams(
            dimension_semantics=("parallel",),
            vmem_limit_bytes=_vmem_limit(p1_need)),
    )(embeddings)

    lab = labels.astype(jnp.int32)
    lab_row = lab.reshape(n, 1)   # sublane-major column of labels
    lab_col = lab.reshape(1, n)   # lane-major row of labels (no in-kernel .T)

    # ---- Pass 2: upper-triangular tile schedule (row-major so the row tile
    # stays resident across consecutive grid steps -> only col tiles re-DMA).
    tri_i, tri_j = np.triu_indices(grid_m)
    i_idx = jnp.asarray(tri_i, dtype=jnp.int32)
    j_idx = jnp.asarray(tri_j, dtype=jnp.int32)
    n_tiles = int(tri_i.shape[0])

    kernel = functools.partial(
        _siglip_tri_kernel, temperature=float(temperature), n_total=n)

    p2_need = 4 * block * d * emb_bytes + 12 * block * block
    loss = pl.pallas_call(
        kernel,
        out_shape=jax.ShapeDtypeStruct((1, 1), jnp.float32),
        grid_spec=pltpu.PrefetchScalarGridSpec(
            num_scalar_prefetch=2,
            grid=(n_tiles,),
            in_specs=[
                pl.BlockSpec((block, d), lambda t, it, jt: (it[t], 0)),  # rows
                pl.BlockSpec((block, d), lambda t, it, jt: (jt[t], 0)),  # cols
                pl.BlockSpec((block, 1), lambda t, it, jt: (it[t], 0)),  # labels r
                pl.BlockSpec((1, block), lambda t, it, jt: (0, jt[t])),  # labels c
            ],
            out_specs=pl.BlockSpec(memory_space=pltpu.MemorySpace.SMEM),
            scratch_shapes=[pltpu.VMEM((1, block), jnp.float32)],
        ),
        compiler_params=pltpu.CompilerParams(
            dimension_semantics=("arbitrary",),
            vmem_limit_bytes=_vmem_limit(p2_need)),
    )(i_idx, j_idx, emb_n, emb_n, lab_row, lab_col)
    return loss[0, 0]


def _reference_loss(embeddings, labels, temperature=0.07):
    """Pure-JAX reference mirroring the PyTorch forward (sigmoid + clamped BCE)."""
    x = embeddings.astype(jnp.float32)
    norm = jnp.sqrt(jnp.sum(x * x, axis=1, keepdims=True))
    xn = x / jnp.maximum(norm, 1e-12)
    sim = (xn @ xn.T) / temperature
    lm = (labels[:, None] == labels[None, :]).astype(jnp.float32)
    n = x.shape[0]
    mask = ~jnp.eye(n, dtype=bool)
    p = jax.nn.sigmoid(sim)
    bce = -(lm * jnp.maximum(jnp.log(p), -100.0)
            + (1 - lm) * jnp.maximum(jnp.log(1 - p), -100.0))
    return jnp.sum(jnp.where(mask, bce, 0.0)) / (n * (n - 1))


if __name__ == "__main__":
    key = jax.random.PRNGKey(0)
    k1, k2 = jax.random.split(key)
    N, D = 256, 64
    embeddings = jax.random.normal(k1, (N, D), dtype=jnp.float32)
    labels = jax.random.randint(k2, (N,), 0, 8, dtype=jnp.int32)

    ref = _reference_loss(embeddings, labels, temperature=0.07)

    # f32 matmul path with block=128 -> grid_m=2, 3 upper-triangular tiles
    # (exercises diag mask, off-diag doubling, init and finalize). Tight check.
    loss_f32 = siglip_loss(embeddings, labels, temperature=0.07, block=128,
                           matmul_dtype=jnp.float32)
    loss_f32 = jax.block_until_ready(loss_f32)
    assert jnp.allclose(loss_f32, ref, rtol=1e-4, atol=1e-5), (loss_f32, ref)

    # Default path: bf16 MXU fast path, auto tile size. Looser tolerance.
    loss_bf16 = jax.block_until_ready(
        siglip_loss(embeddings, labels, temperature=0.07))
    assert jnp.allclose(loss_bf16, ref, rtol=5e-2, atol=5e-3), (loss_bf16, ref)

    print("KERNEL_OK")
</pallas_src>

<mosaic_0001>
module attributes {stable_mosaic.version = 11 : i64} {
  func.func @_l2_normalize_kernel(%arg0: i32, %arg1: memref<128x64xf32, #tpu.memory_space<vmem>>, %arg2: memref<128x64xf32, #tpu.memory_space<vmem>>) attributes {dimension_semantics = [#tpu.dimension_semantics<parallel>], iteration_bounds = array<i64: 2>, scalar_prefetch = 0 : i64, scratch_operands = 0 : i64, tpu.core_type = #tpu.core_type<tc>, window_params = [{transform_indices = @transform_0, window_bounds = array<i64: 128, 64>}, {transform_indices = @transform_1, window_bounds = array<i64: 128, 64>}]} {
    %c0 = arith.constant 0 : index
    %c0_0 = arith.constant 0 : index
    %0 = vector.load %arg1[%c0, %c0_0] : memref<128x64xf32, #tpu.memory_space<vmem>>, vector<128x64xf32>
    %1 = arith.mulf %0, %0 : vector<128x64xf32>
    %cst = arith.constant dense<0.000000e+00> : vector<128xf32>
    %2 = vector.multi_reduction <add>, %1, %cst [1] : vector<128x64xf32> to vector<128xf32>
    %3 = vector.shape_cast %2 : vector<128xf32> to vector<128x1xf32>
    %cst_1 = arith.constant 1.000000e-24 : f32
    %4 = vector.broadcast %cst_1 : f32 to vector<128x1xf32>
    %5 = arith.maximumf %3, %4 : vector<128x1xf32>
    %6 = math.rsqrt %5 : vector<128x1xf32>
    %7 = vector.broadcast %6 : vector<128x1xf32> to vector<128x64xf32>
    %8 = arith.mulf %0, %7 : vector<128x64xf32>
    %c0_2 = arith.constant 0 : index
    %c0_3 = arith.constant 0 : index
    %9 = vector.load %arg2[%c0_2, %c0_3] : memref<128x64xf32, #tpu.memory_space<vmem>>, vector<128x64xf32>
    tpu.vector_store %arg2[%c0_2, %c0_3], %8 {strides = array<i32>} : memref<128x64xf32, #tpu.memory_space<vmem>>, vector<128x64xf32>,
    return
  }
  func.func @transform_0(%arg0: i32) -> (i32, i32) {
    %c0_i32 = arith.constant 0 : i32
    %c0_i32_0 = arith.constant 0 : i32
    return %arg0, %c0_i32 : i32, i32
  }
  func.func @transform_1(%arg0: i32) -> (i32, i32) {
    %c0_i32 = arith.constant 0 : i32
    %c0_i32_0 = arith.constant 0 : i32
    return %arg0, %c0_i32 : i32, i32
  }
}

</mosaic_0001>

<llo_original>
// kernel: tpu_custom_call.1
$region0: #{tpu_custom_call.1}
  #allocation0 [shape = 'u32[]', space=smem, size = 0x4, offset = 0x4, fixed_abs, tag = 'smem constant byte address 0x4 - core index']
  #allocation1 [shape = 'u32[144,128]{1,0:T(1,128)}', space=vmem, size = 0x12000, scoped, tag = 'internal scratch']
  %s0 = inlined_call_operand.vmem [shape: f32[256,64], index: 0, kind: input, shape index: {}]
  %s1 = inlined_call_operand.vmem [shape: f32[256,64], index: 1, kind: output, shape index: {}]
  %s2 = sld [smem:[#allocation0]]
  $region37: #{tpu_custom_call.1} parent=0
    _
  %s4 = ssub.s32 1, %s2
  %s5 = scalar_select 0, %s4, %s2
  loop: start=0, step=1, limit=4
  $region2: #{tpu_custom_call.1} parent=0 // loop_pre_header
    _
  $region3: #{tpu_custom_call.1} parent=0 // loop_header
    %s7 = sphi 0, %s11
    %p8 = scmp.ge.s32.totalorder %s7, 4
    %s17 = sphi 0, %s19
    %s20 = sphi 0, %s17
    %s21 = sphi 0, %s20
    %s37 = sphi 0, %s21
    %s43 = sphi 0, %s45
    %s46 = sphi 0, %s43
    %s47 = sphi 0, %s46
    %s63 = sphi 0, %s47
  $region4: #{tpu_custom_call.1} parent=0 // loop_header_branch
    %10 = sbr.rel (%p8) target = $region8
  $region5: #{tpu_custom_call.1} parent=0 // loop_body
    %s12 = ssub.s32 %s7, 1
    %s13 = ssub.s32 %s7, 2
    %s14 = sadd.s32 %s7, 1
    %s15 = ssub.s32 %s7, %s14
    %p16 = scmp.eq.s32.totalorder %s15, 0
    %s18 = sadd.s32 %s17, 1
    %s19 = scalar_select %p16, %s17, %s18
    %p22 = pneg %p16
    %p23 = scmp.eq.s32.totalorder %s7, 1
    %p24 = por %p22, %p23
    %p25 = scmp.ne.s32.totalorder %s17, %s20
    %p26 = scmp.eq.s32.totalorder %s7, 0
    %p27 = por %p25, %p26
    %p28 = scmp.ne.s32.totalorder %s17, %s20
    %p29 = scmp.eq.s32.totalorder %s12, 1
    %p30 = por %p28, %p29
    %p31 = scmp.ne.s32.totalorder %s20, %s21
    %p32 = scmp.eq.s32.totalorder %s12, 0
    %p33 = por %p31, %p32
    %p34 = scmp.ne.s32.totalorder %s20, %s21
    %p35 = scmp.eq.s32.totalorder %s13, 1
    %p36 = por %p34, %p35
    %p38 = scmp.ne.s32.totalorder %s21, %s37
    %p39 = scmp.eq.s32.totalorder %s13, 0
    %p40 = por %p38, %p39
    %s41 = ssub.s32 %s7, %s14
    %p42 = scmp.eq.s32.totalorder %s41, 0
    %s44 = sadd.s32 %s43, 1
    %s45 = scalar_select %p42, %s43, %s44
    %p48 = pneg %p42
    %p49 = scmp.eq.s32.totalorder %s7, 1
    %p50 = por %p48, %p49
    %p51 = scmp.ne.s32.totalorder %s43, %s46
    %p52 = scmp.eq.s32.totalorder %s7, 0
    %p53 = por %p51, %p52
    %p54 = scmp.ne.s32.totalorder %s43, %s46
    %p55 = scmp.eq.s32.totalorder %s12, 1
    %p56 = por %p54, %p55
    %p57 = scmp.ne.s32.totalorder %s46, %s47
    %p58 = scmp.eq.s32.totalorder %s12, 0
    %p59 = por %p57, %p58
    %p60 = scmp.ne.s32.totalorder %s46, %s47
    %p61 = scmp.eq.s32.totalorder %s13, 1
    %p62 = por %p60, %p61
    %p64 = scmp.ne.s32.totalorder %s47, %s63
    %p65 = scmp.eq.s32.totalorder %s13, 0
    %p66 = por %p64, %p65
    %p67 = scmp.le.s32.totalorder 1, %s7
    %p68 = scmp.lt.s32.totalorder %s7, 3
    %p69 = pnand %p67, %p68
    %p70 = pneg %p69
    // Predicated region
    $region9: #{tpu_custom_call.1} parent=5 // pred_check
      _
    $region10: #{tpu_custom_call.1} parent=5 // pred_check_branch
      %72 = sbr.rel (%p69) target = $region12
    $region11: #{tpu_custom_call.1} parent=5 // pred_region
      %s73 = ssub.s32 %s7, 1
    $region12: #{tpu_custom_call.1} parent=5 // pred_fallthru
      _
    %p74 = scmp.lt.s32.totalorder %s7, 2
    // Predicated region
    $region13: #{tpu_custom_call.1} parent=5 // pred_check
      %p75 = pneg %p74
    $region14: #{tpu_custom_call.1} parent=5 // pred_check_branch
      %77 = sbr.rel (%p75) target = $region16
    $region15: #{tpu_custom_call.1} parent=5 // pred_region
      // Predicated region
      $region17: #{tpu_custom_call.1} parent=15 // pred_check
        %p78 = pneg %p27
      $region18: #{tpu_custom_call.1} parent=15 // pred_check_branch
        %80 = sbr.rel (%p78) target = $region20
      $region19: #{tpu_custom_call.1} parent=15 // pred_region
        %s81 = smul.u32 16, %s7
        %p82 = scmp.lt.s32.totalorder %s81, 31
        %s83 = scalar_select %p82, %s81, 31
        %s84 = smul.addr %s83, 8
        %s85 = scalar_lea.vmem %s0, %s84
        %s86 = smul.u32 16, %s7
      $region20: #{tpu_custom_call.1} parent=15 // pred_fallthru
        _
    $region16: #{tpu_custom_call.1} parent=5 // pred_fallthru
      _
    %p87 = scmp.le.s32.totalorder 1, %s7
    %p88 = scmp.lt.s32.totalorder %s7, 3
    %p89 = pnand %p87, %p88
    %p90 = pneg %p89
    // Predicated region
    $region21: #{tpu_custom_call.1} parent=5 // pred_check
      _
    $region22: #{tpu_custom_call.1} parent=5 // pred_check_branch
      %92 = sbr.rel (%p89) target = $region24
    $region23: #{tpu_custom_call.1} parent=5 // pred_region
      %s93 = ssub.s32 %s7, 1
      %s94 = smul.u32 16, %s12
      %p95 = scmp.lt.s32.totalorder %s94, 31
      %s96 = scalar_select %p95, %s94, 31
      %s97 = smul.addr %s96, 8
      %s98 = scalar_lea.vmem %s0, %s97
      %p99 = pneg %p33
      %p100 = pneg %p30
      %p101 = pneg %p59
      %p102 = pneg %p56
      %s103 = smul.u32 16, %s12
      %p104 = scmp.lt.s32.totalorder %s103, 31
      %s105 = scalar_select %p104, %s103, 31
      %s106 = smul.addr %s105, 8
      %s107 = scalar_lea.vmem %s1, %s106
      %s108 = smul.u32 16, %s12
      %p109 = scmp.lt.s32.totalorder %s108, 31
      %s110 = scalar_select %p109, %s108, 31
      %s111 = smul.addr %s110, 8
      %s112 = scalar_lea.vmem %s0, %s111
      %s113 = smul.u32 16, %s12
      %s114 = smul.u32 16, %s12
      %p115 = scmp.lt.s32.totalorder %s114, 31
      %s116 = scalar_select %p115, %s114, 31
      %s117 = smul.addr %s116, 8
      %s118 = scalar_lea.vmem %s1, %s117
      %s119 = smul.u32 16, %s12
      %v120 = vld [vmem:[%s112] sm:$0xff]
      %v121 = vld [vmem:[%s112 + $0x8] sm:$0xff]
      %v122 = vld [vmem:[%s112 + $0x10] sm:$0xff]
      %v123 = vld [vmem:[%s112 + $0x18] sm:$0xff]
      %v124 = vld [vmem:[%s112 + $0x20] sm:$0xff]
      %v125 = vld [vmem:[%s112 + $0x28] sm:$0xff]
      %v126 = vld [vmem:[%s112 + $0x30] sm:$0xff]
      %v127 = vld [vmem:[%s112 + $0x38] sm:$0xff]
      %v128 = vld [vmem:[%s112 + $0x40] sm:$0xff]
      %v129 = vld [vmem:[%s112 + $0x48] sm:$0xff]
      %v130 = vld [vmem:[%s112 + $0x50] sm:$0xff]
      %v131 = vld [vmem:[%s112 + $0x58] sm:$0xff]
      %v132 = vld [vmem:[%s112 + $0x60] sm:$0xff]
      %v133 = vld [vmem:[%s112 + $0x68] sm:$0xff]
      %v134 = vld [vmem:[%s112 + $0x70] sm:$0xff]
      %v135 = vld [vmem:[%s112 + $0x78] sm:$0xff]
      %v136 = vmul.f32 %v120, %v120
      %v137 = vmul.f32 %v121, %v121
      %v138 = vmul.f32 %v122, %v122
      %v139 = vmul.f32 %v123, %v123
      %v140 = vmul.f32 %v124, %v124
      %v141 = vmul.f32 %v125, %v125
      %v142 = vmul.f32 %v126, %v126
      %v143 = vmul.f32 %v127, %v127
      %v144 = vmul.f32 %v128, %v128
      %v145 = vmul.f32 %v129, %v129
      %v146 = vmul.f32 %v130, %v130
      %v147 = vmul.f32 %v131, %v131
      %v148 = vmul.f32 %v132, %v132
      %v149 = vmul.f32 %v133, %v133
      %v150 = vmul.f32 %v134, %v134
      %v151 = vmul.f32 %v135, %v135
      %vm152 = vcmask 523264
      %v153 = vsel %vm152, %v136, 0.0
      %154 = vadd.xlane.f32.xlu0 %v153
      %v155 = vpop.xlane.xlu0 %154
      %v156 = vsel %vm152, %v137, 0.0
      %157 = vadd.xlane.f32.xlu0 %v156
      %v158 = vpop.xlane.xlu0 %157
      %v159 = vsel %vm152, %v138, 0.0
      %160 = vadd.xlane.f32.xlu0 %v159
      %v161 = vpop.xlane.xlu0 %160
      %v162 = vsel %vm152, %v139, 0.0
      %163 = vadd.xlane.f32.xlu0 %v162
      %v164 = vpop.xlane.xlu0 %163
      %v165 = vsel %vm152, %v140, 0.0
      %166 = vadd.xlane.f32.xlu0 %v165
      %v167 = vpop.xlane.xlu0 %166
      %v168 = vsel %vm152, %v141, 0.0
      %169 = vadd.xlane.f32.xlu0 %v168
      %v170 = vpop.xlane.xlu0 %169
      %v171 = vsel %vm152, %v142, 0.0
      %172 = vadd.xlane.f32.xlu0 %v171
      %v173 = vpop.xlane.xlu0 %172
      %v174 = vsel %vm152, %v143, 0.0
      %175 = vadd.xlane.f32.xlu0 %v174
      %v176 = vpop.xlane.xlu0 %175
      %v177 = vsel %vm152, %v144, 0.0
      %178 = vadd.xlane.f32.xlu0 %v177
      %v179 = vpop.xlane.xlu0 %178
      %v180 = vsel %vm152, %v145, 0.0
      %181 = vadd.xlane.f32.xlu0 %v180
      %v182 = vpop.xlane.xlu0 %181
      %v183 = vsel %vm152, %v146, 0.0
      %184 = vadd.xlane.f32.xlu0 %v183
      %v185 = vpop.xlane.xlu0 %184
      %v186 = vsel %vm152, %v147, 0.0
      %187 = vadd.xlane.f32.xlu0 %v186
      %v188 = vpop.xlane.xlu0 %187
      %v189 = vsel %vm152, %v148, 0.0
      %190 = vadd.xlane.f32.xlu0 %v189
      %v191 = vpop.xlane.xlu0 %190
      %v192 = vsel %vm152, %v149, 0.0
      %193 = vadd.xlane.f32.xlu0 %v192
      %v194 = vpop.xlane.xlu0 %193
      %v195 = vsel %vm152, %v150, 0.0
      %196 = vadd.xlane.f32.xlu0 %v195
      %v197 = vpop.xlane.xlu0 %196
      %v198 = vsel %vm152, %v151, 0.0
      %199 = vadd.xlane.f32.xlu0 %v198
      %v200 = vpop.xlane.xlu0 %199
      %v201 = vmax.f32 %v155, 1e-24
      %v202 = vmax.f32 %v158, 1e-24
      %v203 = vmax.f32 %v161, 1e-24
      %v204 = vmax.f32 %v164, 1e-24
      %v205 = vmax.f32 %v167, 1e-24
      %v206 = vmax.f32 %v170, 1e-24
      %v207 = vmax.f32 %v173, 1e-24
      %v208 = vmax.f32 %v176, 1e-24
      %v209 = vmax.f32 %v179, 1e-24
      %v210 = vmax.f32 %v182, 1e-24
      %v211 = vmax.f32 %v185, 1e-24
      %v212 = vmax.f32 %v188, 1e-24
      %v213 = vmax.f32 %v191, 1e-24
      %v214 = vmax.f32 %v194, 1e-24
      %v215 = vmax.f32 %v197, 1e-24
      %v216 = vmax.f32 %v200, 1e-24
      %v217 = vrsqrt.pop %v201
      %v218 = vrsqrt.pop %v202
      %v219 = vrsqrt.pop %v203
      %v220 = vrsqrt.pop %v204
      %v221 = vrsqrt.pop %v205
      %v222 = vrsqrt.pop %v206
      %v223 = vrsqrt.pop %v207
      %v224 = vrsqrt.pop %v208
      %v225 = vrsqrt.pop %v209
      %v226 = vrsqrt.pop %v210
      %v227 = vrsqrt.pop %v211
      %v228 = vrsqrt.pop %v212
      %v229 = vrsqrt.pop %v213
      %v230 = vrsqrt.pop %v214
      %v231 = vrsqrt.pop %v215
      %v232 = vrsqrt.pop %v216
      %v233 = vmul.f32 %v120, %v217
      %v234 = vmul.f32 %v121, %v218
      %v235 = vmul.f32 %v122, %v219
      %v236 = vmul.f32 %v123, %v220
      %v237 = vmul.f32 %v124, %v221
      %v238 = vmul.f32 %v125, %v222
      %v239 = vmul.f32 %v126, %v223
      %v240 = vmul.f32 %v127, %v224
      %v241 = vmul.f32 %v128, %v225
      %v242 = vmul.f32 %v129, %v226
      %v243 = vmul.f32 %v130, %v227
      %v244 = vmul.f32 %v131, %v228
      %v245 = vmul.f32 %v132, %v229
      %v246 = vmul.f32 %v133, %v230
      %v247 = vmul.f32 %v134, %v231
      %v248 = vmul.f32 %v135, %v232
      %249 = vst.msk [vmem:[%s118] sm:$0xff] %vm152, %v233
      %250 = vst.msk [vmem:[%s118 + $0x8] sm:$0xff] %vm152, %v234
      %251 = vst.msk [vmem:[%s118 + $0x10] sm:$0xff] %vm152, %v235
      %252 = vst.msk [vmem:[%s118 + $0x18] sm:$0xff] %vm152, %v236
      %253 = vst.msk [vmem:[%s118 + $0x20] sm:$0xff] %vm152, %v237
      %254 = vst.msk [vmem:[%s118 + $0x28] sm:$0xff] %vm152, %v238
      %255 = vst.msk [vmem:[%s118 + $0x30] sm:$0xff] %vm152, %v239
      %256 = vst.msk [vmem:[%s118 + $0x38] sm:$0xff] %vm152, %v240
      %257 = vst.msk [vmem:[%s118 + $0x40] sm:$0xff] %vm152, %v241
      %258 = vst.msk [vmem:[%s118 + $0x48] sm:$0xff] %vm152, %v242
      %259 = vst.msk [vmem:[%s118 + $0x50] sm:$0xff] %vm152, %v243
      %260 = vst.msk [vmem:[%s118 + $0x58] sm:$0xff] %vm152, %v244
      %261 = vst.msk [vmem:[%s118 + $0x60] sm:$0xff] %vm152, %v245
      %262 = vst.msk [vmem:[%s118 + $0x68] sm:$0xff] %vm152, %v246
      %263 = vst.msk [vmem:[%s118 + $0x70] sm:$0xff] %vm152, %v247
      %264 = vst.msk [vmem:[%s118 + $0x78] sm:$0xff] %vm152, %v248
      %s265 = smul.u32 16, %s12
      %p266 = scmp.lt.s32.totalorder %s265, 31
      %s267 = scalar_select %p266, %s265, 31
      %s268 = smul.addr %s267, 8
      %s269 = scalar_lea.vmem %s1, %s268
      // Predicated region
      $region25: #{tpu_custom_call.1} parent=23 // pred_check
        %p270 = pneg %p56
      $region26: #{tpu_custom_call.1} parent=23 // pred_check_branch
        %272 = sbr.rel (%p270) target = $region28
      $region27: #{tpu_custom_call.1} parent=23 // pred_region
        %s273 = smul.u32 16, %s12
      $region28: #{tpu_custom_call.1} parent=23 // pred_fallthru
        _
    $region24: #{tpu_custom_call.1} parent=5 // pred_fallthru
      _
    %p274 = scmp.le.s32.totalorder 2, %s7
    // Predicated region
    $region29: #{tpu_custom_call.1} parent=5 // pred_check
      %p275 = pneg %p274
    $region30: #{tpu_custom_call.1} parent=5 // pred_check_branch
      %277 = sbr.rel (%p275) target = $region32
    $region31: #{tpu_custom_call.1} parent=5 // pred_region
      %s278 = ssub.s32 %s7, 2
      // Predicated region
      $region33: #{tpu_custom_call.1} parent=31 // pred_check
        %p279 = pneg %p62
      $region34: #{tpu_custom_call.1} parent=31 // pred_check_branch
        %281 = sbr.rel (%p279) target = $region36
      $region35: #{tpu_custom_call.1} parent=31 // pred_region
        %s282 = smul.u32 16, %s13
        %p283 = scmp.lt.s32.totalorder %s282, 31
        %s284 = scalar_select %p283, %s282, 31
        %s285 = smul.addr %s284, 8
        %s286 = scalar_lea.vmem %s1, %s285
      $region36: #{tpu_custom_call.1} parent=31 // pred_fallthru
        _
    $region32: #{tpu_custom_call.1} parent=5 // pred_fallthru
      _
  $region6: #{tpu_custom_call.1} parent=0 // loop_footer
    %s11 = sadd.s32 1, %s7
  $region7: #{tpu_custom_call.1} parent=0 // loop_footer_branch
    %6 = sbr.rel target = $region3
  $region8: #{tpu_custom_call.1} parent=0 // loop_exit
    _

</llo_original>
